<compile_context>
chip_gen: v6e
topology: v6e:2x2x1
jax: 0.10.0
libtpu: 0.0.40
codegen_flags: <defaults>
</compile_context>

<pallas_src>
import jax
import jax.numpy as jnp
from jax.experimental import pallas as pl
from jax.experimental.pallas import tpu as pltpu


LANE = 128      # lane-dense padding unit -- applied to OUTPUT feature dims only
MAX_TB = 512    # max batch-tile rows (~85% of HBM roofline per measured tiling data)


def _round_up(n, m):
    return ((n + m - 1) // m) * m


def _batch_tile(B):
    """Pick the batch tile size.

    * B < 64: a single tile -- the call is launch/latency bound, extra grid
      steps only add per-step overhead.
    * B >= 64: at least 2 grid steps (so dimension_semantics=("parallel",)
      can shard across v7x's two TensorCores), capped at MAX_TB rows,
      rounded to a multiple of 16 to keep sublane-aligned blocks.
    """
    if B < 64:
        return B
    return min(MAX_TB, _round_up(-(-B // 2), 16))


def _vmem_limit_bytes(tb, obs_dim, state_dim, o_p, act_p, with_state):
    """Explicit scoped-VMEM budget: double-buffered activation tiles +
    single-buffered resident weights, with headroom, clamped to the device."""
    need = 2 * tb * obs_dim * 4 + 2 * tb * act_p * 4        # x / logits tiles (f32)
    if with_state:
        need += 2 * tb * state_dim * 4
    need += (obs_dim * o_p + o_p * act_p) * 2 + (o_p + act_p) * 4   # weights (bf16) + biases (f32)
    if with_state:
        need += state_dim * act_p * 2
    try:
        cap = pltpu.get_tpu_info().vmem_capacity_bytes       # 64 MiB/TC on v7x, 128 MiB v5e/v6e
    except Exception:
        cap = 64 * 1024 * 1024
    return int(min(cap - (8 << 20), max(2 * need + (2 << 20), 8 << 20)))


# ---------------------------------------------------------------------------
# Kernels
# ---------------------------------------------------------------------------
def actor_kernel_nostate(x_ref, w1_ref, b1_ref, w2o_ref, b2_ref, logits_ref):
    # obs_net: Linear + ReLU.  bf16 cast of the activation happens here (VPU),
    # overlapping the MXU matmuls; f32 accumulation throughout.
    x = x_ref[...].astype(jnp.bfloat16)
    h = jnp.dot(x, w1_ref[...], preferred_element_type=jnp.float32)
    h = jnp.maximum(h + b1_ref[...], 0.0)
    # final_layer; state term dropped (state == 0 exactly in this variant)
    logits = jnp.dot(h.astype(jnp.bfloat16), w2o_ref[...],
                     preferred_element_type=jnp.float32)
    logits_ref[...] = (logits + b2_ref[...]).astype(logits_ref.dtype)


def actor_kernel_state(x_ref, w1_ref, b1_ref, state_ref, w2o_ref, w2s_ref,
                       b2_ref, logits_ref):
    x = x_ref[...].astype(jnp.bfloat16)
    h = jnp.dot(x, w1_ref[...], preferred_element_type=jnp.float32)
    h = jnp.maximum(h + b1_ref[...], 0.0)
    logits = jnp.dot(h.astype(jnp.bfloat16), w2o_ref[...],
                     preferred_element_type=jnp.float32)
    logits += jnp.dot(state_ref[...].astype(jnp.bfloat16), w2s_ref[...],
                      preferred_element_type=jnp.float32)
    logits_ref[...] = (logits + b2_ref[...]).astype(logits_ref.dtype)


# ---------------------------------------------------------------------------
# Wrapper
# ---------------------------------------------------------------------------
def simple_nethack_actor(x, params, state=None, return_padded=False):
    """Fused forward.  x: [B, obs_dim] (f32, unpadded).
    Returns (logits [B, n_actions], state).  With return_padded=True the
    lane-dense [B, act_p] f32 slab is returned so the consumer can fuse the
    column slice (padded columns are exactly zero)."""
    meta = params["meta"]
    n_actions, state_dim = meta["n_actions"], meta["state_dim"]
    obs_dim, o_p = params["w1"].shape
    act_p = params["w2_obs"].shape[1]

    B = x.shape[0]
    tb = _batch_tile(B)
    grid = (pl.cdiv(B, tb),)
    with_state = state is not None

    cparams = pltpu.CompilerParams(
        dimension_semantics=("parallel",),
        vmem_limit_bytes=_vmem_limit_bytes(tb, obs_dim, state_dim, o_p, act_p,
                                           with_state))

    # Activation specs: K dim = full array dim (no 128-padding, no wrapper pad).
    x_spec = pl.BlockSpec((tb, obs_dim), lambda i: (i, 0))
    out_spec = pl.BlockSpec((tb, act_p), lambda i: (i, 0))
    out_shape = jax.ShapeDtypeStruct((B, act_p), jnp.float32)

    flops = 2 * B * (obs_dim * o_p + o_p * act_p)
    bytes_accessed = (x.size * 4 + params["w1"].size * 2 + params["b1"].size * 4
                      + params["w2_obs"].size * 2 + params["b2"].size * 4
                      + B * act_p * 4)
    if with_state:
        flops += 2 * B * state_dim * act_p
        bytes_accessed += state.size * 4 + params["w2_state"].size * 2
    cost = pl.CostEstimate(flops=flops, transcendentals=0,
                           bytes_accessed=bytes_accessed)

    def run(single_buffer_weights):
        if single_buffer_weights:
            pm = pl.Buffered(1)    # resident weights: one VMEM buffer is enough
            wspec = lambda shape: pl.BlockSpec(shape, lambda i: (0, 0),
                                               pipeline_mode=pm)
        else:
            wspec = lambda shape: pl.BlockSpec(shape, lambda i: (0, 0))

        if with_state:
            kernel = actor_kernel_state
            in_specs = [x_spec,
                        wspec((obs_dim, o_p)),
                        wspec((1, o_p)),
                        pl.BlockSpec((tb, state_dim), lambda i: (i, 0)),
                        wspec((o_p, act_p)),
                        wspec((state_dim, act_p)),
                        wspec((1, act_p))]
            operands = (x, params["w1"], params["b1"], state,
                        params["w2_obs"], params["w2_state"], params["b2"])
        else:
            kernel = actor_kernel_nostate
            in_specs = [x_spec,
                        wspec((obs_dim, o_p)),
                        wspec((1, o_p)),
                        wspec((o_p, act_p)),
                        wspec((1, act_p))]
            operands = (x, params["w1"], params["b1"],
                        params["w2_obs"], params["b2"])

        return pl.pallas_call(
            kernel,
            out_shape=out_shape,
            grid=grid,
            in_specs=in_specs,
            out_specs=out_spec,
            compiler_params=cparams,
            cost_estimate=cost,
        )(*operands)

    try:
        logits_pad = run(single_buffer_weights=True)
    except Exception:
        # pipeline_mode / pl.Buffered not supported on this jax/libtpu build:
        # fall back to default double-buffered weights (perf-only difference).
        logits_pad = run(single_buffer_weights=False)

    state_out = state if with_state else jnp.zeros((B, state_dim), jnp.float32)
    if return_padded:
        return logits_pad, state_out
    # Padded output columns are exactly zero; slice back to n_actions.
    return logits_pad[:, :n_actions], state_out


# ---------------------------------------------------------------------------
# Params: only the lane (output-feature) dims are padded to 128; K dims stay
# at their natural size so activations need no wrapper-side pad/cast.  Zero
# padding keeps the math exact; weights in bf16, biases in f32.
# ---------------------------------------------------------------------------
def init_params(key, obs_dim, o_dim, state_dim, n_actions):
    k1, k2, k3, k4 = jax.random.split(key, 4)
    o_p, act_p = _round_up(o_dim, LANE), _round_up(n_actions, LANE)

    def pad_cols(a, c):
        return jnp.pad(a, ((0, 0), (0, c - a.shape[1])))

    w1 = jax.random.normal(k1, (obs_dim, o_dim), jnp.float32) * 0.1
    b1 = jax.random.normal(k2, (1, o_dim), jnp.float32) * 0.1
    w2o = jax.random.normal(k3, (o_dim, n_actions), jnp.float32) * 0.1
    w2s = jax.random.normal(k4, (state_dim, n_actions), jnp.float32) * 0.1
    b2 = jnp.zeros((1, n_actions), jnp.float32)

    w2o_p = jnp.pad(w2o, ((0, o_p - o_dim), (0, act_p - n_actions)))

    return {
        "w1": pad_cols(w1, o_p).astype(jnp.bfloat16),        # (obs_dim, o_p)
        "b1": pad_cols(b1, o_p),                              # (1, o_p)   f32
        "w2_obs": w2o_p.astype(jnp.bfloat16),                 # (o_p, act_p)
        "w2_state": pad_cols(w2s, act_p).astype(jnp.bfloat16),# (state_dim, act_p)
        "b2": pad_cols(b2, act_p),                             # (1, act_p) f32
        "meta": {"obs_dim": obs_dim, "o_dim": o_dim,
                 "state_dim": state_dim, "n_actions": n_actions},
    }


# ---------------------------------------------------------------------------
# Plain-JAX reference mirroring the PyTorch module (same bf16 operand dtypes;
# NOTE: bf16 operands + f32 accumulation differ from a pure-fp32 PyTorch run —
# error grows ~sqrt(K) for large obs_dim; this is the documented precision
# contract of the kernel).
# ---------------------------------------------------------------------------
def reference_forward(x, params, state=None):
    meta = params["meta"]
    o_dim, n_actions = meta["o_dim"], meta["n_actions"]
    state_dim = meta["state_dim"]
    B = x.shape[0]
    if state is None:
        state = jnp.zeros((B, state_dim), jnp.float32)
    w1 = params["w1"][:, :o_dim]
    b1 = params["b1"][:, :o_dim]
    w2o = params["w2_obs"][:o_dim, :n_actions]
    w2s = params["w2_state"][:, :n_actions]
    b2 = params["b2"][:, :n_actions]
    h = jnp.maximum(
        jnp.dot(x.astype(jnp.bfloat16), w1,
                preferred_element_type=jnp.float32) + b1, 0.0)
    cat = jnp.concatenate([h.astype(jnp.bfloat16),
                           state.astype(jnp.bfloat16)], axis=1)
    w_full = jnp.concatenate([w2o, w2s], axis=0)
    logits = jnp.dot(cat, w_full, preferred_element_type=jnp.float32) + b2
    return logits, state


if __name__ == "__main__":
    OBS_DIM, O_DIM, STATE_DIM, N_ACTIONS = 32, 32, 16, 16
    key = jax.random.PRNGKey(0)
    kx, ks, kp, kb = jax.random.split(key, 4)
    params = init_params(kp, OBS_DIM, O_DIM, STATE_DIM, N_ACTIONS)

    # --- tiny batch (latency-bound, single grid step) ------------------------
    B = 8
    x = jax.random.normal(kx, (B, OBS_DIM), jnp.float32)

    # state=None path (dedicated kernel: no state DMA, no dead matmul)
    logits0, state0 = simple_nethack_actor(x, params, state=None)
    logits0 = jax.block_until_ready(logits0)
    ref0, _ = reference_forward(x, params, state=None)
    assert logits0.shape == (B, N_ACTIONS)
    assert state0.shape == (B, STATE_DIM)
    assert jnp.allclose(logits0, ref0, atol=1e-4, rtol=1e-4)

    # explicit-state path
    state_in = jax.random.normal(ks, (B, STATE_DIM), jnp.float32)
    logits1, state1 = simple_nethack_actor(x, params, state=state_in)
    logits1 = jax.block_until_ready(logits1)
    ref1, _ = reference_forward(x, params, state=state_in)
    assert logits1.shape == (B, N_ACTIONS)
    assert jnp.allclose(logits1, ref1, atol=1e-4, rtol=1e-4)
    assert jnp.array_equal(state1, state_in)

    # --- larger batch (>=2 "parallel" grid steps: exercises batch tiling) ----
    B2 = 96
    x2 = jax.random.normal(kb, (B2, OBS_DIM), jnp.float32)
    logits2, _ = simple_nethack_actor(x2, params, state=None)
    logits2 = jax.block_until_ready(logits2)
    ref2, _ = reference_forward(x2, params, state=None)
    assert logits2.shape == (B2, N_ACTIONS)
    assert jnp.allclose(logits2, ref2, atol=1e-4, rtol=1e-4)

    # TODO(synk): the real obs_net is an arbitrary nn.Module; only a Linear+ReLU
    # head is fused here.
    print("KERNEL_OK")
</pallas_src>

<mosaic_0001>
module attributes {stable_mosaic.version = 11 : i64} {
  func.func @actor_kernel_nostate(%arg0: i32, %arg1: memref<8x32xf32, #tpu.memory_space<vmem>>, %arg2: memref<32x128xbf16, #tpu.memory_space<vmem>>, %arg3: memref<1x128xf32, #tpu.memory_space<vmem>>, %arg4: memref<128x128xbf16, #tpu.memory_space<vmem>>, %arg5: memref<1x128xf32, #tpu.memory_space<vmem>>, %arg6: memref<8x128xf32, #tpu.memory_space<vmem>>) attributes {dimension_semantics = [#tpu.dimension_semantics<parallel>], iteration_bounds = array<i64: 1>, scalar_prefetch = 0 : i64, scratch_operands = 0 : i64, tpu.core_type = #tpu.core_type<tc>, window_params = [{transform_indices = @transform_0, window_bounds = array<i64: 8, 32>}, {pipeline_mode = #tpu.pipeline_mode<synchronous>, transform_indices = @transform_1, window_bounds = array<i64: 32, 128>}, {pipeline_mode = #tpu.pipeline_mode<synchronous>, transform_indices = @transform_2, window_bounds = array<i64: 1, 128>}, {pipeline_mode = #tpu.pipeline_mode<synchronous>, transform_indices = @transform_3, window_bounds = array<i64: 128, 128>}, {pipeline_mode = #tpu.pipeline_mode<synchronous>, transform_indices = @transform_4, window_bounds = array<i64: 1, 128>}, {transform_indices = @transform_5, window_bounds = array<i64: 8, 128>}]} {
    %c0 = arith.constant 0 : index
    %c0_0 = arith.constant 0 : index
    %0 = vector.load %arg1[%c0, %c0_0] : memref<8x32xf32, #tpu.memory_space<vmem>>, vector<8x32xf32>
    %1 = arith.truncf %0 : vector<8x32xf32> to vector<8x32xbf16>
    %c0_1 = arith.constant 0 : index
    %c0_2 = arith.constant 0 : index
    %2 = vector.load %arg2[%c0_1, %c0_2] : memref<32x128xbf16, #tpu.memory_space<vmem>>, vector<32x128xbf16>
    %cst = arith.constant dense<0.000000e+00> : vector<8x128xf32>
    %3 = tpu.matmul %1, %2, %cst {dimension_numbers = #tpu.dot_dimension_numbers<[1], [0], [0], [1], [0, 0, 1, 1], [], []>} : vector<8x32xbf16>, vector<32x128xbf16>, vector<8x128xf32> -> vector<8x128xf32>
    %c0_3 = arith.constant 0 : index
    %c0_4 = arith.constant 0 : index
    %4 = vector.load %arg3[%c0_3, %c0_4] : memref<1x128xf32, #tpu.memory_space<vmem>>, vector<1x128xf32>
    %5 = vector.broadcast %4 : vector<1x128xf32> to vector<8x128xf32>
    %6 = arith.addf %3, %5 : vector<8x128xf32>
    %cst_5 = arith.constant 0.000000e+00 : f32
    %7 = vector.broadcast %cst_5 : f32 to vector<8x128xf32>
    %8 = arith.maximumf %6, %7 : vector<8x128xf32>
    %9 = arith.truncf %8 : vector<8x128xf32> to vector<8x128xbf16>
    %c0_6 = arith.constant 0 : index
    %c0_7 = arith.constant 0 : index
    %10 = vector.load %arg4[%c0_6, %c0_7] : memref<128x128xbf16, #tpu.memory_space<vmem>>, vector<128x128xbf16>
    %cst_8 = arith.constant dense<0.000000e+00> : vector<8x128xf32>
    %11 = tpu.matmul %9, %10, %cst_8 {dimension_numbers = #tpu.dot_dimension_numbers<[1], [0], [0], [1], [0, 0, 1, 1], [], []>} : vector<8x128xbf16>, vector<128x128xbf16>, vector<8x128xf32> -> vector<8x128xf32>
    %c0_9 = arith.constant 0 : index
    %c0_10 = arith.constant 0 : index
    %12 = vector.load %arg5[%c0_9, %c0_10] : memref<1x128xf32, #tpu.memory_space<vmem>>, vector<1x128xf32>
    %13 = vector.broadcast %12 : vector<1x128xf32> to vector<8x128xf32>
    %14 = arith.addf %11, %13 : vector<8x128xf32>
    %c0_11 = arith.constant 0 : index
    %c0_12 = arith.constant 0 : index
    %15 = vector.load %arg6[%c0_11, %c0_12] : memref<8x128xf32, #tpu.memory_space<vmem>>, vector<8x128xf32>
    tpu.vector_store %arg6[%c0_11, %c0_12], %14 {strides = array<i32>} : memref<8x128xf32, #tpu.memory_space<vmem>>, vector<8x128xf32>,
    return
  }
  func.func @transform_0(%arg0: i32) -> (i32, i32) {
    %c0_i32 = arith.constant 0 : i32
    %c0_i32_0 = arith.constant 0 : i32
    return %arg0, %c0_i32 : i32, i32
  }
  func.func @transform_1(%arg0: i32) -> (i32, i32) {
    %c0_i32 = arith.constant 0 : i32
    %c0_i32_0 = arith.constant 0 : i32
    %c0_i32_1 = arith.constant 0 : i32
    return %c0_i32, %c0_i32_0 : i32, i32
  }
  func.func @transform_2(%arg0: i32) -> (i32, i32) {
    %c0_i32 = arith.constant 0 : i32
    %c0_i32_0 = arith.constant 0 : i32
    %c0_i32_1 = arith.constant 0 : i32
    return %c0_i32, %c0_i32_0 : i32, i32
  }
  func.func @transform_3(%arg0: i32) -> (i32, i32) {
    %c0_i32 = arith.constant 0 : i32
    %c0_i32_0 = arith.constant 0 : i32
    %c0_i32_1 = arith.constant 0 : i32
    return %c0_i32, %c0_i32_0 : i32, i32
  }
  func.func @transform_4(%arg0: i32) -> (i32, i32) {
    %c0_i32 = arith.constant 0 : i32
    %c0_i32_0 = arith.constant 0 : i32
    %c0_i32_1 = arith.constant 0 : i32
    return %c0_i32, %c0_i32_0 : i32, i32
  }
  func.func @transform_5(%arg0: i32) -> (i32, i32) {
    %c0_i32 = arith.constant 0 : i32
    %c0_i32_0 = arith.constant 0 : i32
    return %arg0, %c0_i32 : i32, i32
  }
}

module attributes {stable_mosaic.version = 11 : i64} {
  func.func @actor_kernel_nostate(%arg0: i32, %arg1: memref<8x32xf32, #tpu.memory_space<vmem>>, %arg2: memref<32x128xbf16, #tpu.memory_space<vmem>>, %arg3: memref<1x128xf32, #tpu.memory_space<vmem>>, %arg4: memref<128x128xbf16, #tpu.memory_space<vmem>>, %arg5: memref<1x128xf32, #tpu.memory_space<vmem>>, %arg6: memref<8x128xf32, #tpu.memory_space<vmem>>) attributes {dimension_semantics = [#tpu.dimension_semantics<parallel>], iteration_bounds = array<i64: 1>, scalar_prefetch = 0 : i64, scratch_operands = 0 : i64, tpu.core_type = #tpu.core_type<tc>, window_params = [{transform_indices = @transform_0, window_bounds = array<i64: 8, 32>}, {pipeline_mode = #tpu.pipeline_mode<synchronous>, transform_indices = @transform_1, window_bounds = array<i64: 32, 128>}, {pipeline_mode = #tpu.pipeline_mode<synchronous>, transform_indices = @transform_2, window_bounds = array<i64: 1, 128>}, {pipeline_mode = #tpu.pipeline_mode<synchronous>, transform_indices = @transform_3, window_bounds = array<i64: 128, 128>}, {pipeline_mode = #tpu.pipeline_mode<synchronous>, transform_indices = @transform_4, window_bounds = array<i64: 1, 128>}, {transform_indices = @transform_5, window_bounds = array<i64: 8, 128>}]} {
    %c0 = arith.constant 0 : index
    %c0_0 = arith.constant 0 : index
    %0 = vector.load %arg1[%c0, %c0_0] : memref<8x32xf32, #tpu.memory_space<vmem>>, vector<8x32xf32>
    %1 = arith.truncf %0 : vector<8x32xf32> to vector<8x32xbf16>
    %c0_1 = arith.constant 0 : index
    %c0_2 = arith.constant 0 : index
    %2 = vector.load %arg2[%c0_1, %c0_2] : memref<32x128xbf16, #tpu.memory_space<vmem>>, vector<32x128xbf16>
    %cst = arith.constant dense<0.000000e+00> : vector<8x128xf32>
    %3 = tpu.matmul %1, %2, %cst {dimension_numbers = #tpu.dot_dimension_numbers<[1], [0], [0], [1], [0, 0, 1, 1], [], []>} : vector<8x32xbf16>, vector<32x128xbf16>, vector<8x128xf32> -> vector<8x128xf32>
    %c0_3 = arith.constant 0 : index
    %c0_4 = arith.constant 0 : index
    %4 = vector.load %arg3[%c0_3, %c0_4] : memref<1x128xf32, #tpu.memory_space<vmem>>, vector<1x128xf32>
    %5 = vector.broadcast %4 : vector<1x128xf32> to vector<8x128xf32>
    %6 = arith.addf %3, %5 : vector<8x128xf32>
    %cst_5 = arith.constant 0.000000e+00 : f32
    %7 = vector.broadcast %cst_5 : f32 to vector<8x128xf32>
    %8 = arith.maximumf %6, %7 : vector<8x128xf32>
    %9 = arith.truncf %8 : vector<8x128xf32> to vector<8x128xbf16>
    %c0_6 = arith.constant 0 : index
    %c0_7 = arith.constant 0 : index
    %10 = vector.load %arg4[%c0_6, %c0_7] : memref<128x128xbf16, #tpu.memory_space<vmem>>, vector<128x128xbf16>
    %cst_8 = arith.constant dense<0.000000e+00> : vector<8x128xf32>
    %11 = tpu.matmul %9, %10, %cst_8 {dimension_numbers = #tpu.dot_dimension_numbers<[1], [0], [0], [1], [0, 0, 1, 1], [], []>} : vector<8x128xbf16>, vector<128x128xbf16>, vector<8x128xf32> -> vector<8x128xf32>
    %c0_9 = arith.constant 0 : index
    %c0_10 = arith.constant 0 : index
    %12 = vector.load %arg5[%c0_9, %c0_10] : memref<1x128xf32, #tpu.memory_space<vmem>>, vector<1x128xf32>
    %13 = vector.broadcast %12 : vector<1x128xf32> to vector<8x128xf32>
    %14 = arith.addf %11, %13 : vector<8x128xf32>
    %c0_11 = arith.constant 0 : index
    %c0_12 = arith.constant 0 : index
    %15 = vector.load %arg6[%c0_11, %c0_12] : memref<8x128xf32, #tpu.memory_space<vmem>>, vector<8x128xf32>
    tpu.vector_store %arg6[%c0_11, %c0_12], %14 {strides = array<i32>} : memref<8x128xf32, #tpu.memory_space<vmem>>, vector<8x128xf32>,
    return
  }
  func.func @transform_0(%arg0: i32) -> (i32, i32) {
    %c0_i32 = arith.constant 0 : i32
    %c0_i32_0 = arith.constant 0 : i32
    return %arg0, %c0_i32 : i32, i32
  }
  func.func @transform_1(%arg0: i32) -> (i32, i32) {
    %c0_i32 = arith.constant 0 : i32
    %c0_i32_0 = arith.constant 0 : i32
    %c0_i32_1 = arith.constant 0 : i32
    return %c0_i32, %c0_i32_0 : i32, i32
  }
  func.func @transform_2(%arg0: i32) -> (i32, i32) {
    %c0_i32 = arith.constant 0 : i32
    %c0_i32_0 = arith.constant 0 : i32
    %c0_i32_1 = arith.constant 0 : i32
    return %c0_i32, %c0_i32_0 : i32, i32
  }
  func.func @transform_3(%arg0: i32) -> (i32, i32) {
    %c0_i32 = arith.constant 0 : i32
    %c0_i32_0 = arith.constant 0 : i32
    %c0_i32_1 = arith.constant 0 : i32
    return %c0_i32, %c0_i32_0 : i32, i32
  }
  func.func @transform_4(%arg0: i32) -> (i32, i32) {
    %c0_i32 = arith.constant 0 : i32
    %c0_i32_0 = arith.constant 0 : i32
    %c0_i32_1 = arith.constant 0 : i32
    return %c0_i32, %c0_i32_0 : i32, i32
  }
  func.func @transform_5(%arg0: i32) -> (i32, i32) {
    %c0_i32 = arith.constant 0 : i32
    %c0_i32_0 = arith.constant 0 : i32
    return %arg0, %c0_i32 : i32, i32
  }
}

</mosaic_0001>

<llo_original>
// kernel: tpu_custom_call.1
$region0: #{tpu_custom_call.1}
  #allocation0 [shape = 'u32[]', space=smem, size = 0x4, offset = 0x4, fixed_abs, tag = 'smem constant byte address 0x4 - core index']
  #allocation1 [shape = 'u32[144,128]{1,0:T(1,128)}', space=vmem, size = 0x12000, scoped, tag = 'internal scratch']
  %s0 = inlined_call_operand.hbm [shape: f32[8,32], index: 0, kind: input, shape index: {}]
  %s1 = inlined_call_operand.hbm [shape: bf16[32,128], index: 1, kind: input, shape index: {}]
  %s2 = inlined_call_operand.vmem [shape: f32[1,128], index: 2, kind: input, shape index: {}]
  %s3 = inlined_call_operand.hbm [shape: bf16[128,128], index: 3, kind: input, shape index: {}]
  %s4 = inlined_call_operand.vmem [shape: f32[1,128], index: 4, kind: input, shape index: {}]
  %s5 = inlined_call_operand.hbm [shape: f32[8,128], index: 5, kind: output, shape index: {}]
  %s6 = sld [smem:[#allocation0]]
  $region42: #{tpu_custom_call.1} parent=0
    _
  %s8 = ssub.s32 1, %s6
  %s9 = scalar_select 0, %s8, %s6
  $region1: #{tpu_custom_call.1} parent=0
    #allocation2 [shape = 'u8[4096]{0}', space=vmem, size = 0x1000, scoped, tag = 'input window, operand 0, single buffered']
    #allocation3 [shape = 's32[1]{0}', space=sflag, size = 0x4, scoped, tag = 'scoped memory for tpu_custom_call.1']
    #allocation4 [shape = 's32[1]{0}', space=sflag, size = 0x4, scoped, tag = 'scoped memory for tpu_custom_call.1']
    #allocation5 [shape = 'u8[8192]{0}', space=vmem, size = 0x2000, scoped, tag = 'input window, operand 1, single buffered']
    #allocation6 [shape = 's32[1]{0}', space=sflag, size = 0x4, scoped, tag = 'scoped memory for tpu_custom_call.1']
    #allocation7 [shape = 'u8[32768]{0}', space=vmem, size = 0x8000, scoped, tag = 'input window, operand 3, single buffered']
    #allocation8 [shape = 'u8[4096]{0}', space=vmem, size = 0x1000, scoped, tag = 'output window, operand 0, single buffered']
    %10 = vsyncpa [#allocation3], 0
    %11 = vsyncpa [#allocation6], 0
    %12 = vsyncpa [#allocation4], 0
    // Predicated region
    $region2: #{tpu_custom_call.1} parent=1 // pred_check
      _
    $region3: #{tpu_custom_call.1} parent=1 // pred_check_branch
      %14 = sbr.rel (0) target = $region5
    $region4: #{tpu_custom_call.1} parent=1 // pred_region
      %s16 = ssub.s32 128, 128
      %17 = vsyncadd [#allocation3], %s16
      %s19 = sshll.u32 [#allocation2], 4
      %s20 = int_to_ptr.vmem [resolvable:$true] %s19
      %22 = dma.hbm_to_vmem [thread:$0]  %s0, 128, %s20, [#allocation3]
    $region5: #{tpu_custom_call.1} parent=1 // pred_fallthru
      _
    // Predicated region
    $region6: #{tpu_custom_call.1} parent=1 // pred_check
      _
    $region7: #{tpu_custom_call.1} parent=1 // pred_check_branch
      %24 = sbr.rel (0) target = $region9
    $region8: #{tpu_custom_call.1} parent=1 // pred_region
      %s26 = ssub.s32 256, 256
      %27 = vsyncadd [#allocation6], %s26
      %s28 = sshll.u32 [#allocation5], 4
      %s29 = int_to_ptr.vmem [resolvable:$true] %s28
      %34 = dma.hbm_to_vmem [thread:$0]  %s1, 256, %s29, [#allocation6], 64, 64, 4
    $region9: #{tpu_custom_call.1} parent=1 // pred_fallthru
      _
    // Predicated region
    $region10: #{tpu_custom_call.1} parent=1 // pred_check
      _
    $region11: #{tpu_custom_call.1} parent=1 // pred_check_branch
      %36 = sbr.rel (0) target = $region13
    $region12: #{tpu_custom_call.1} parent=1 // pred_region
      _
    $region13: #{tpu_custom_call.1} parent=1 // pred_fallthru
      _
    // Predicated region
    $region14: #{tpu_custom_call.1} parent=1 // pred_check
      _
    $region15: #{tpu_custom_call.1} parent=1 // pred_check_branch
      %38 = sbr.rel (0) target = $region17
    $region16: #{tpu_custom_call.1} parent=1 // pred_region
      %s40 = ssub.s32 1024, 1024
      %41 = vsyncadd [#allocation6], %s40
      %s42 = sshll.u32 [#allocation7], 4
      %s43 = int_to_ptr.vmem [resolvable:$true] %s42
      %48 = dma.hbm_to_vmem [thread:$0]  %s3, 1024, %s43, [#allocation6], 64, 64, 4
    $region17: #{tpu_custom_call.1} parent=1 // pred_fallthru
      _
    // Predicated region
    $region18: #{tpu_custom_call.1} parent=1 // pred_check
      _
    $region19: #{tpu_custom_call.1} parent=1 // pred_check_branch
      %50 = sbr.rel (0) target = $region21
    $region20: #{tpu_custom_call.1} parent=1 // pred_region
      _
    $region21: #{tpu_custom_call.1} parent=1 // pred_fallthru
      _
    // Predicated region
    $region22: #{tpu_custom_call.1} parent=1 // pred_check
      _
    $region23: #{tpu_custom_call.1} parent=1 // pred_check_branch
      %52 = sbr.rel (0) target = $region25
    $region24: #{tpu_custom_call.1} parent=1 // pred_region
      %53 = dma.done [#allocation3], 128
    $region25: #{tpu_custom_call.1} parent=1 // pred_fallthru
      _
    // Predicated region
    $region26: #{tpu_custom_call.1} parent=1 // pred_check
      _
    $region27: #{tpu_custom_call.1} parent=1 // pred_check_branch
      %55 = sbr.rel (0) target = $region29
    $region28: #{tpu_custom_call.1} parent=1 // pred_region
      %56 = dma.done [#allocation6], 256
    $region29: #{tpu_custom_call.1} parent=1 // pred_fallthru
      _
    // Predicated region
    $region30: #{tpu_custom_call.1} parent=1 // pred_check
      _
    $region31: #{tpu_custom_call.1} parent=1 // pred_check_branch
      %58 = sbr.rel (0) target = $region33
    $region32: #{tpu_custom_call.1} parent=1 // pred_region
      %59 = dma.done [#allocation6], 1024
    $region33: #{tpu_custom_call.1} parent=1 // pred_fallthru
      _
    %v61 = vld [vmem:[#allocation2] sm:$0xff]
    %v62 = vpack.c.bf16 %v61, %v61
    %v63 = vld [vmem:[#allocation5] sm:$0xf]
    %v64 = vld [vmem:[#allocation5 + $0x4] sm:$0xf]
    %v65 = vld [vmem:[#allocation5 + $0x8] sm:$0xf]
    %v66 = vld [vmem:[#allocation5 + $0xc] sm:$0xf]
    %v67 = vld [vmem:[%s2] sm:$0x1]
    %v69 = vlaneseq
    %v70 = vshrl.u32 %v69, 7
    %v71 = vsub.s32 0, %v70
    %v72 = vrot.slane %v67, %v71
    %v78 = vunpack.c.l.b16 %v63
    %v79 = vunpack.c.l.b16 %v64
    %v80 = vunpack.c.l.b16 %v65
    %v81 = vunpack.c.l.b16 %v66
    %v82 = vpack.c.b16 %v79, %v78
    %v83 = vpack.c.b16 %v81, %v80
    %vm86 = vcmask 261120
    %v88 = vsel %vm86, %v62, 0
    %90 = vmatprep.subr.bf16.mxu0 0
    %91 = vmatpush1.bf16.msra.mxu0 0
    %92 = vmatprep.subr.bf16.mxu0 0
    %93 = vmatpush1.bf16.msra.mxu0 0
    %94 = vmatprep.subr.bf16.mxu0 0
    %95 = vmatpush1.bf16.msra.mxu0 0
    %96 = vmatprep.subr.bf16.mxu0 0
    %97 = vmatpush1.bf16.msra.mxu0 0
    %98 = vmatprep.subr.bf16.mxu0 0
    %99 = vmatpush1.bf16.msra.mxu0 0
    %100 = vmatprep.subr.bf16.mxu0 0
    %101 = vmatpush1.bf16.msra.mxu0 0
    %102 = vmatprep.subr.bf16.mxu0 0
    %103 = vmatpush1.bf16.msra.mxu0 %v83
    %104 = vmatprep.subr.bf16.mxu0 0
    %105 = vmatpush1.bf16.msra.mxu0 %v82
    %106 = vmatprep.subr.bf16.mxu0 0
    %107 = vmatpush2.bf16.msra.mxu0 0
    %108 = vmatprep.subr.bf16.mxu0 0
    %109 = vmatpush2.bf16.msra.mxu0 0
    %110 = vmatprep.subr.bf16.mxu0 0
    %111 = vmatpush2.bf16.msra.mxu0 0
    %112 = vmatprep.subr.bf16.mxu0 0
    %113 = vmatpush2.bf16.msra.mxu0 0
    %114 = vmatprep.subr.bf16.mxu0 0
    %115 = vmatpush2.bf16.msra.mxu0 0
    %116 = vmatprep.subr.bf16.mxu0 0
    %117 = vmatpush2.bf16.msra.mxu0 0
    %118 = vmatprep.subr.bf16.mxu0 0
    %119 = vmatpush2.bf16.msra.mxu0 0
    %120 = vmatprep.subr.bf16.mxu0 0
    %121 = vmatpush2.bf16.msra.mxu0 0
    %122 = vmatprep.mubr.bf16.mxu0 0
    %123 = vmatmul.mubr.bf16.gmra.mxu0 %v88
    %v124 = vpop.f32.mrf.mxu0
    %v125 = vadd.f32 %v72, %v124
    %v126 = vpop.f32.mrf.mxu0
    %v127 = vpop.f32.mrf.mxu0
    %v128 = vpop.f32.mrf.mxu0
    %129 = vdwg.mxu0
    %v130 = vmax.f32 %v125, 0.0
    %v131 = vpack.c.bf16 %v130, %v130
    %v132 = vld [vmem:[#allocation7] sm:$0xf]
    %v133 = vld [vmem:[#allocation7 + $0x4] sm:$0xf]
    %v134 = vld [vmem:[#allocation7 + $0x8] sm:$0xf]
    %v135 = vld [vmem:[#allocation7 + $0xc] sm:$0xf]
    %v136 = vld [vmem:[#allocation7 + $0x10] sm:$0xf]
    %v137 = vld [vmem:[#allocation7 + $0x14] sm:$0xf]
    %v138 = vld [vmem:[#allocation7 + $0x18] sm:$0xf]
    %v139 = vld [vmem:[#allocation7 + $0x1c] sm:$0xf]
    %v140 = vld [vmem:[#allocation7 + $0x20] sm:$0xf]
    %v141 = vld [vmem:[#allocation7 + $0x24] sm:$0xf]
    %v142 = vld [vmem:[#allocation7 + $0x28] sm:$0xf]
    %v143 = vld [vmem:[#allocation7 + $0x2c] sm:$0xf]
    %v144 = vld [vmem:[#allocation7 + $0x30] sm:$0xf]
    %v145 = vld [vmem:[#allocation7 + $0x34] sm:$0xf]
    %v146 = vld [vmem:[#allocation7 + $0x38] sm:$0xf]
    %v147 = vld [vmem:[#allocation7 + $0x3c] sm:$0xf]
    %v148 = vld [vmem:[%s4] sm:$0x1]
    %v150 = vlaneseq
    %v151 = vshrl.u32 %v150, 7
    %v152 = vsub.s32 0, %v151
    %v153 = vrot.slane %v148, %v152
    %v171 = vunpack.c.l.b16 %v132
    %v172 = vunpack.c.l.b16 %v133
    %v173 = vunpack.c.l.b16 %v134
    %v174 = vunpack.c.l.b16 %v135
    %v175 = vunpack.c.l.b16 %v136
    %v176 = vunpack.c.l.b16 %v137
    %v177 = vunpack.c.l.b16 %v138
    %v178 = vunpack.c.l.b16 %v139
    %v179 = vunpack.c.l.b16 %v140
    %v180 = vunpack.c.l.b16 %v141
    %v181 = vunpack.c.l.b16 %v142
    %v182 = vunpack.c.l.b16 %v143
    %v183 = vunpack.c.l.b16 %v144
    %v184 = vunpack.c.l.b16 %v145
    %v185 = vunpack.c.l.b16 %v146
    %v186 = vunpack.c.l.b16 %v147
    %v187 = vpack.c.b16 %v172, %v171
    %v188 = vpack.c.b16 %v174, %v173
    %v189 = vpack.c.b16 %v176, %v175
    %v190 = vpack.c.b16 %v178, %v177
    %v191 = vpack.c.b16 %v180, %v179
    %v192 = vpack.c.b16 %v182, %v181
    %v193 = vpack.c.b16 %v184, %v183
    %v194 = vpack.c.b16 %v186, %v185
    %203 = vmatprep.subr.bf16.mxu0 0
    %204 = vmatpush1.bf16.msra.mxu0 %v194
    %205 = vmatprep.subr.bf16.mxu0 0
    %206 = vmatpush1.bf16.msra.mxu0 %v193
    %207 = vmatprep.subr.bf16.mxu0 0
    %208 = vmatpush1.bf16.msra.mxu0 %v192
    %209 = vmatprep.subr.bf16.mxu0 0
    %210 = vmatpush1.bf16.msra.mxu0 %v191
    %211 = vmatprep.subr.bf16.mxu0 0
    %212 = vmatpush1.bf16.msra.mxu0 %v190
    %213 = vmatprep.subr.bf16.mxu0 0
    %214 = vmatpush1.bf16.msra.mxu0 %v189
    %215 = vmatprep.subr.bf16.mxu0 0
    %216 = vmatpush1.bf16.msra.mxu0 %v188
    %217 = vmatprep.subr.bf16.mxu0 0
    %218 = vmatpush1.bf16.msra.mxu0 %v187
    %219 = vmatprep.subr.bf16.mxu0 0
    %220 = vmatpush2.bf16.msra.mxu0 0
    %221 = vmatprep.subr.bf16.mxu0 0
    %222 = vmatpush2.bf16.msra.mxu0 0
    %223 = vmatprep.subr.bf16.mxu0 0
    %224 = vmatpush2.bf16.msra.mxu0 0
    %225 = vmatprep.subr.bf16.mxu0 0
    %226 = vmatpush2.bf16.msra.mxu0 0
    %227 = vmatprep.subr.bf16.mxu0 0
    %228 = vmatpush2.bf16.msra.mxu0 0
    %229 = vmatprep.subr.bf16.mxu0 0
    %230 = vmatpush2.bf16.msra.mxu0 0
    %231 = vmatprep.subr.bf16.mxu0 0
    %232 = vmatpush2.bf16.msra.mxu0 0
    %233 = vmatprep.subr.bf16.mxu0 0
    %234 = vmatpush2.bf16.msra.mxu0 0
    %235 = vmatprep.mubr.bf16.mxu0 0
    %236 = vmatmul.mubr.bf16.gmra.mxu0 %v131
    %v237 = vpop.f32.mrf.mxu0
    %v238 = vadd.f32 %v153, %v237
    %v239 = vpop.f32.mrf.mxu0
    %v240 = vpop.f32.mrf.mxu0
    %v241 = vpop.f32.mrf.mxu0
    %242 = vdwg.mxu0
    %243 = vst [vmem:[#allocation8] sm:$0xff] %v238
    // Predicated region
    $region34: #{tpu_custom_call.1} parent=1 // pred_check
      _
    $region35: #{tpu_custom_call.1} parent=1 // pred_check_branch
      %245 = sbr.rel (0) target = $region37
    $region36: #{tpu_custom_call.1} parent=1 // pred_region
      %s247 = ssub.s32 128, 128
      %248 = vsyncadd [#allocation4], %s247
      %s250 = sshll.u32 [#allocation8], 4
      %s251 = int_to_ptr.vmem [resolvable:$true] %s250
      %253 = dma.vmem_to_hbm [thread:$0]  %s251, 128, %s5, [#allocation4]
    $region37: #{tpu_custom_call.1} parent=1 // pred_fallthru
      _
    // Predicated region
    $region38: #{tpu_custom_call.1} parent=1 // pred_check
      _
    $region39: #{tpu_custom_call.1} parent=1 // pred_check_branch
      %255 = sbr.rel (0) target = $region41
    $region40: #{tpu_custom_call.1} parent=1 // pred_region
      %256 = dma.done [#allocation4], 128
    $region41: #{tpu_custom_call.1} parent=1 // pred_fallthru
      _
    %257 = vsyncpa [#allocation3], 1
    %258 = vsyncpa [#allocation6], 1
    %259 = vsyncpa [#allocation4], 1

// kernel: tpu_custom_call.1
$region0: #{tpu_custom_call.1}
  #allocation0 [shape = 'u32[]', space=smem, size = 0x4, offset = 0x4, fixed_abs, tag = 'smem constant byte address 0x4 - core index']
  #allocation1 [shape = 'u32[144,128]{1,0:T(1,128)}', space=vmem, size = 0x12000, scoped, tag = 'internal scratch']
  %s0 = inlined_call_operand.hbm [shape: f32[8,32], index: 0, kind: input, shape index: {}]
  %s1 = inlined_call_operand.hbm [shape: bf16[32,128], index: 1, kind: input, shape index: {}]
  %s2 = inlined_call_operand.vmem [shape: f32[1,128], index: 2, kind: input, shape index: {}]
  %s3 = inlined_call_operand.hbm [shape: bf16[128,128], index: 3, kind: input, shape index: {}]
  %s4 = inlined_call_operand.vmem [shape: f32[1,128], index: 4, kind: input, shape index: {}]
  %s5 = inlined_call_operand.hbm [shape: f32[8,128], index: 5, kind: output, shape index: {}]
  %s6 = sld [smem:[#allocation0]]
  $region42: #{tpu_custom_call.1} parent=0
    _
  %s8 = ssub.s32 1, %s6
  %s9 = scalar_select 0, %s8, %s6
  $region1: #{tpu_custom_call.1} parent=0
    #allocation2 [shape = 'u8[4096]{0}', space=vmem, size = 0x1000, scoped, tag = 'input window, operand 0, single buffered']
    #allocation3 [shape = 's32[1]{0}', space=sflag, size = 0x4, scoped, tag = 'scoped memory for tpu_custom_call.1']
    #allocation4 [shape = 's32[1]{0}', space=sflag, size = 0x4, scoped, tag = 'scoped memory for tpu_custom_call.1']
    #allocation5 [shape = 'u8[8192]{0}', space=vmem, size = 0x2000, scoped, tag = 'input window, operand 1, single buffered']
    #allocation6 [shape = 's32[1]{0}', space=sflag, size = 0x4, scoped, tag = 'scoped memory for tpu_custom_call.1']
    #allocation7 [shape = 'u8[32768]{0}', space=vmem, size = 0x8000, scoped, tag = 'input window, operand 3, single buffered']
    #allocation8 [shape = 'u8[4096]{0}', space=vmem, size = 0x1000, scoped, tag = 'output window, operand 0, single buffered']
    %10 = vsyncpa [#allocation3], 0
    %11 = vsyncpa [#allocation6], 0
    %12 = vsyncpa [#allocation4], 0
    // Predicated region
    $region2: #{tpu_custom_call.1} parent=1 // pred_check
      _
    $region3: #{tpu_custom_call.1} parent=1 // pred_check_branch
      %14 = sbr.rel (0) target = $region5
    $region4: #{tpu_custom_call.1} parent=1 // pred_region
      %s16 = ssub.s32 128, 128
      %17 = vsyncadd [#allocation3], %s16
      %s19 = sshll.u32 [#allocation2], 4
      %s20 = int_to_ptr.vmem [resolvable:$true] %s19
      %22 = dma.hbm_to_vmem [thread:$0]  %s0, 128, %s20, [#allocation3]
    $region5: #{tpu_custom_call.1} parent=1 // pred_fallthru
      _
    // Predicated region
    $region6: #{tpu_custom_call.1} parent=1 // pred_check
      _
    $region7: #{tpu_custom_call.1} parent=1 // pred_check_branch
      %24 = sbr.rel (0) target = $region9
    $region8: #{tpu_custom_call.1} parent=1 // pred_region
      %s26 = ssub.s32 256, 256
      %27 = vsyncadd [#allocation6], %s26
      %s28 = sshll.u32 [#allocation5], 4
      %s29 = int_to_ptr.vmem [resolvable:$true] %s28
      %34 = dma.hbm_to_vmem [thread:$0]  %s1, 256, %s29, [#allocation6], 64, 64, 4
    $region9: #{tpu_custom_call.1} parent=1 // pred_fallthru
      _
    // Predicated region
    $region10: #{tpu_custom_call.1} parent=1 // pred_check
      _
    $region11: #{tpu_custom_call.1} parent=1 // pred_check_branch
      %36 = sbr.rel (0) target = $region13
    $region12: #{tpu_custom_call.1} parent=1 // pred_region
      _
    $region13: #{tpu_custom_call.1} parent=1 // pred_fallthru
      _
    // Predicated region
    $region14: #{tpu_custom_call.1} parent=1 // pred_check
      _
    $region15: #{tpu_custom_call.1} parent=1 // pred_check_branch
      %38 = sbr.rel (0) target = $region17
    $region16: #{tpu_custom_call.1} parent=1 // pred_region
      %s40 = ssub.s32 1024, 1024
      %41 = vsyncadd [#allocation6], %s40
      %s42 = sshll.u32 [#allocation7], 4
      %s43 = int_to_ptr.vmem [resolvable:$true] %s42
      %48 = dma.hbm_to_vmem [thread:$0]  %s3, 1024, %s43, [#allocation6], 64, 64, 4
    $region17: #{tpu_custom_call.1} parent=1 // pred_fallthru
      _
    // Predicated region
    $region18: #{tpu_custom_call.1} parent=1 // pred_check
      _
    $region19: #{tpu_custom_call.1} parent=1 // pred_check_branch
      %50 = sbr.rel (0) target = $region21
    $region20: #{tpu_custom_call.1} parent=1 // pred_region
      _
    $region21: #{tpu_custom_call.1} parent=1 // pred_fallthru
      _
    // Predicated region
    $region22: #{tpu_custom_call.1} parent=1 // pred_check
      _
    $region23: #{tpu_custom_call.1} parent=1 // pred_check_branch
      %52 = sbr.rel (0) target = $region25
    $region24: #{tpu_custom_call.1} parent=1 // pred_region
      %53 = dma.done [#allocation3], 128
    $region25: #{tpu_custom_call.1} parent=1 // pred_fallthru
      _
    // Predicated region
    $region26: #{tpu_custom_call.1} parent=1 // pred_check
      _
    $region27: #{tpu_custom_call.1} parent=1 // pred_check_branch
      %55 = sbr.rel (0) target = $region29
    $region28: #{tpu_custom_call.1} parent=1 // pred_region
      %56 = dma.done [#allocation6], 256
    $region29: #{tpu_custom_call.1} parent=1 // pred_fallthru
      _
    // Predicated region
    $region30: #{tpu_custom_call.1} parent=1 // pred_check
      _
    $region31: #{tpu_custom_call.1} parent=1 // pred_check_branch
      %58 = sbr.rel (0) target = $region33
    $region32: #{tpu_custom_call.1} parent=1 // pred_region
      %59 = dma.done [#allocation6], 1024
    $region33: #{tpu_custom_call.1} parent=1 // pred_fallthru
      _
    %v61 = vld [vmem:[#allocation2] sm:$0xff]
    %v62 = vpack.c.bf16 %v61, %v61
    %v63 = vld [vmem:[#allocation5] sm:$0xf]
    %v64 = vld [vmem:[#allocation5 + $0x4] sm:$0xf]
    %v65 = vld [vmem:[#allocation5 + $0x8] sm:$0xf]
    %v66 = vld [vmem:[#allocation5 + $0xc] sm:$0xf]
    %v67 = vld [vmem:[%s2] sm:$0x1]
    %v69 = vlaneseq
    %v70 = vshrl.u32 %v69, 7
    %v71 = vsub.s32 0, %v70
    %v72 = vrot.slane %v67, %v71
    %v78 = vunpack.c.l.b16 %v63
    %v79 = vunpack.c.l.b16 %v64
    %v80 = vunpack.c.l.b16 %v65
    %v81 = vunpack.c.l.b16 %v66
    %v82 = vpack.c.b16 %v79, %v78
    %v83 = vpack.c.b16 %v81, %v80
    %vm86 = vcmask 261120
    %v88 = vsel %vm86, %v62, 0
    %90 = vmatprep.subr.bf16.mxu0 0
    %91 = vmatpush1.bf16.msra.mxu0 0
    %92 = vmatprep.subr.bf16.mxu0 0
    %93 = vmatpush1.bf16.msra.mxu0 0
    %94 = vmatprep.subr.bf16.mxu0 0
    %95 = vmatpush1.bf16.msra.mxu0 0
    %96 = vmatprep.subr.bf16.mxu0 0
    %97 = vmatpush1.bf16.msra.mxu0 0
    %98 = vmatprep.subr.bf16.mxu0 0
    %99 = vmatpush1.bf16.msra.mxu0 0
    %100 = vmatprep.subr.bf16.mxu0 0
    %101 = vmatpush1.bf16.msra.mxu0 0
    %102 = vmatprep.subr.bf16.mxu0 0
    %103 = vmatpush1.bf16.msra.mxu0 %v83
    %104 = vmatprep.subr.bf16.mxu0 0
    %105 = vmatpush1.bf16.msra.mxu0 %v82
    %106 = vmatprep.subr.bf16.mxu0 0
    %107 = vmatpush2.bf16.msra.mxu0 0
    %108 = vmatprep.subr.bf16.mxu0 0
    %109 = vmatpush2.bf16.msra.mxu0 0
    %110 = vmatprep.subr.bf16.mxu0 0
    %111 = vmatpush2.bf16.msra.mxu0 0
    %112 = vmatprep.subr.bf16.mxu0 0
    %113 = vmatpush2.bf16.msra.mxu0 0
    %114 = vmatprep.subr.bf16.mxu0 0
    %115 = vmatpush2.bf16.msra.mxu0 0
    %116 = vmatprep.subr.bf16.mxu0 0
    %117 = vmatpush2.bf16.msra.mxu0 0
    %118 = vmatprep.subr.bf16.mxu0 0
    %119 = vmatpush2.bf16.msra.mxu0 0
    %120 = vmatprep.subr.bf16.mxu0 0
    %121 = vmatpush2.bf16.msra.mxu0 0
    %122 = vmatprep.mubr.bf16.mxu0 0
    %123 = vmatmul.mubr.bf16.gmra.mxu0 %v88
    %v124 = vpop.f32.mrf.mxu0
    %v125 = vadd.f32 %v72, %v124
    %v126 = vpop.f32.mrf.mxu0
    %v127 = vpop.f32.mrf.mxu0
    %v128 = vpop.f32.mrf.mxu0
    %129 = vdwg.mxu0
    %v130 = vmax.f32 %v125, 0.0
    %v131 = vpack.c.bf16 %v130, %v130
    %v132 = vld [vmem:[#allocation7] sm:$0xf]
    %v133 = vld [vmem:[#allocation7 + $0x4] sm:$0xf]
    %v134 = vld [vmem:[#allocation7 + $0x8] sm:$0xf]
    %v135 = vld [vmem:[#allocation7 + $0xc] sm:$0xf]
    %v136 = vld [vmem:[#allocation7 + $0x10] sm:$0xf]
    %v137 = vld [vmem:[#allocation7 + $0x14] sm:$0xf]
    %v138 = vld [vmem:[#allocation7 + $0x18] sm:$0xf]
    %v139 = vld [vmem:[#allocation7 + $0x1c] sm:$0xf]
    %v140 = vld [vmem:[#allocation7 + $0x20] sm:$0xf]
    %v141 = vld [vmem:[#allocation7 + $0x24] sm:$0xf]
    %v142 = vld [vmem:[#allocation7 + $0x28] sm:$0xf]
    %v143 = vld [vmem:[#allocation7 + $0x2c] sm:$0xf]
    %v144 = vld [vmem:[#allocation7 + $0x30] sm:$0xf]
    %v145 = vld [vmem:[#allocation7 + $0x34] sm:$0xf]
    %v146 = vld [vmem:[#allocation7 + $0x38] sm:$0xf]
    %v147 = vld [vmem:[#allocation7 + $0x3c] sm:$0xf]
    %v148 = vld [vmem:[%s4] sm:$0x1]
    %v150 = vlaneseq
    %v151 = vshrl.u32 %v150, 7
    %v152 = vsub.s32 0, %v151
    %v153 = vrot.slane %v148, %v152
    %v171 = vunpack.c.l.b16 %v132
    %v172 = vunpack.c.l.b16 %v133
    %v173 = vunpack.c.l.b16 %v134
    %v174 = vunpack.c.l.b16 %v135
    %v175 = vunpack.c.l.b16 %v136
    %v176 = vunpack.c.l.b16 %v137
    %v177 = vunpack.c.l.b16 %v138
    %v178 = vunpack.c.l.b16 %v139
    %v179 = vunpack.c.l.b16 %v140
    %v180 = vunpack.c.l.b16 %v141
    %v181 = vunpack.c.l.b16 %v142
    %v182 = vunpack.c.l.b16 %v143
    %v183 = vunpack.c.l.b16 %v144
    %v184 = vunpack.c.l.b16 %v145
    %v185 = vunpack.c.l.b16 %v146
    %v186 = vunpack.c.l.b16 %v147
    %v187 = vpack.c.b16 %v172, %v171
    %v188 = vpack.c.b16 %v174, %v173
    %v189 = vpack.c.b16 %v176, %v175
    %v190 = vpack.c.b16 %v178, %v177
    %v191 = vpack.c.b16 %v180, %v179
    %v192 = vpack.c.b16 %v182, %v181
    %v193 = vpack.c.b16 %v184, %v183
    %v194 = vpack.c.b16 %v186, %v185
    %203 = vmatprep.subr.bf16.mxu0 0
    %204 = vmatpush1.bf16.msra.mxu0 %v194
    %205 = vmatprep.subr.bf16.mxu0 0
    %206 = vmatpush1.bf16.msra.mxu0 %v193
    %207 = vmatprep.subr.bf16.mxu0 0
    %208 = vmatpush1.bf16.msra.mxu0 %v192
    %209 = vmatprep.subr.bf16.mxu0 0
    %210 = vmatpush1.bf16.msra.mxu0 %v191
    %211 = vmatprep.subr.bf16.mxu0 0
    %212 = vmatpush1.bf16.msra.mxu0 %v190
    %213 = vmatprep.subr.bf16.mxu0 0
    %214 = vmatpush1.bf16.msra.mxu0 %v189
    %215 = vmatprep.subr.bf16.mxu0 0
    %216 = vmatpush1.bf16.msra.mxu0 %v188
    %217 = vmatprep.subr.bf16.mxu0 0
    %218 = vmatpush1.bf16.msra.mxu0 %v187
    %219 = vmatprep.subr.bf16.mxu0 0
    %220 = vmatpush2.bf16.msra.mxu0 0
    %221 = vmatprep.subr.bf16.mxu0 0
    %222 = vmatpush2.bf16.msra.mxu0 0
    %223 = vmatprep.subr.bf16.mxu0 0
    %224 = vmatpush2.bf16.msra.mxu0 0
    %225 = vmatprep.subr.bf16.mxu0 0
    %226 = vmatpush2.bf16.msra.mxu0 0
    %227 = vmatprep.subr.bf16.mxu0 0
    %228 = vmatpush2.bf16.msra.mxu0 0
    %229 = vmatprep.subr.bf16.mxu0 0
    %230 = vmatpush2.bf16.msra.mxu0 0
    %231 = vmatprep.subr.bf16.mxu0 0
    %232 = vmatpush2.bf16.msra.mxu0 0
    %233 = vmatprep.subr.bf16.mxu0 0
    %234 = vmatpush2.bf16.msra.mxu0 0
    %235 = vmatprep.mubr.bf16.mxu0 0
    %236 = vmatmul.mubr.bf16.gmra.mxu0 %v131
    %v237 = vpop.f32.mrf.mxu0
    %v238 = vadd.f32 %v153, %v237
    %v239 = vpop.f32.mrf.mxu0
    %v240 = vpop.f32.mrf.mxu0
    %v241 = vpop.f32.mrf.mxu0
    %242 = vdwg.mxu0
    %243 = vst [vmem:[#allocation8] sm:$0xff] %v238
    // Predicated region
    $region34: #{tpu_custom_call.1} parent=1 // pred_check
      _
    $region35: #{tpu_custom_call.1} parent=1 // pred_check_branch
      %245 = sbr.rel (0) target = $region37
    $region36: #{tpu_custom_call.1} parent=1 // pred_region
      %s247 = ssub.s32 128, 128
      %248 = vsyncadd [#allocation4], %s247
      %s250 = sshll.u32 [#allocation8], 4
      %s251 = int_to_ptr.vmem [resolvable:$true] %s250
      %253 = dma.vmem_to_hbm [thread:$0]  %s251, 128, %s5, [#allocation4]
    $region37: #{tpu_custom_call.1} parent=1 // pred_fallthru
      _
    // Predicated region
    $region38: #{tpu_custom_call.1} parent=1 // pred_check
      _
    $region39: #{tpu_custom_call.1} parent=1 // pred_check_branch
      %255 = sbr.rel (0) target = $region41
    $region40: #{tpu_custom_call.1} parent=1 // pred_region
      %256 = dma.done [#allocation4], 128
    $region41: #{tpu_custom_call.1} parent=1 // pred_fallthru
      _
    %257 = vsyncpa [#allocation3], 1
    %258 = vsyncpa [#allocation6], 1
    %259 = vsyncpa [#allocation4], 1

</llo_original>
